<compile_context>
chip_gen: v7x
topology: tpu7x:2x2x1
jax: 0.10.0
libtpu: 0.0.40
codegen_flags: <defaults>
</compile_context>

<pallas_src>
import math
from typing import List, Optional, Tuple

import jax
import jax.numpy as jnp
from jax.experimental import pallas as pl
from jax.experimental.pallas import tpu as pltpu


# ----------------------------- kernels ------------------------------------ #

def _log_all_kernel(y_ref, o_ref):
    """out = log(y) on the whole tile (all output columns selected)."""
    y = y_ref[...].astype(jnp.float32)
    o_ref[...] = jnp.log(y).astype(o_ref.dtype)


def _log_masked_kernel(y_ref, mask_ref, o_ref):
    """out = where(mask, log(y), y); mask is a (1, L) lane-periodic row."""
    y = y_ref[...].astype(jnp.float32)
    out = jnp.where(mask_ref[...] > 0.5, jnp.log(y), y)
    o_ref[...] = out.astype(o_ref.dtype)


# ----------------------------- wrapper ------------------------------------ #

def _round_up(x: int, mult: int) -> int:
    return ((x + mult - 1) // mult) * mult


def _lane_width(m: int, need_mask: bool) -> int:
    """Pick a lane-dense width: multiple of 128 (and of m when masked), >= 512."""
    if not need_mask:
        return 512
    lcm = m * 128 // math.gcd(m, 128)
    L = lcm
    while L < 512:
        L += lcm
    return L


def log_transform_forward(
    Y: jax.Array,
    Yvar: Optional[jax.Array] = None,
    outputs: Optional[List[int]] = None,
) -> Tuple[jax.Array, Optional[jax.Array]]:
    """Pallas equivalent of Log.forward(Y, Yvar)."""
    if Yvar is not None:
        raise NotImplementedError(
            "Log does not yet support transforming observation noise"
        )

    m = Y.shape[-1]
    N = Y.size
    if N == 0:  # degenerate empty input
        return jnp.log(Y) if outputs is None else Y, Yvar

    # normalize_indices: map possibly-negative indices into [0, m)
    norm_outputs = None
    if outputs is not None:
        norm_outputs = sorted({i % m for i in outputs})
        if norm_outputs == list(range(m)):
            norm_outputs = None  # all columns selected -> mask-free fast path

    need_mask = norm_outputs is not None
    L = _lane_width(m, need_mask)

    # Flatten -> pad -> lane-dense (R, L) slab. Padding value 1.0 keeps log
    # finite on the padded tail; the tail is sliced off afterwards.
    rows_needed = pl.cdiv(N, L)
    TR = min(512, _round_up(rows_needed, 8))        # ~1 MiB f32 blocks
    R = _round_up(rows_needed, TR)
    flat = Y.reshape(-1)
    pad = R * L - N
    if pad:
        flat = jnp.concatenate([flat, jnp.ones((pad,), dtype=Y.dtype)])
    y2d = flat.reshape(R, L)

    grid = (R // TR,)
    data_spec = pl.BlockSpec((TR, L), lambda i: (i, 0))
    compiler_params = pltpu.CompilerParams(dimension_semantics=("parallel",))

    if not need_mask:
        out2d = pl.pallas_call(
            _log_all_kernel,
            out_shape=jax.ShapeDtypeStruct((R, L), Y.dtype),
            grid=grid,
            in_specs=[data_spec],
            out_specs=data_spec,
            compiler_params=compiler_params,
        )(y2d)
    else:
        # Lane c of the slab holds output column (c % m); since L % m == 0 this
        # single (1, L) mask row is valid for every row / every grid step.
        sel = set(norm_outputs)
        mask_row = [1.0 if (c % m) in sel else 0.0 for c in range(L)]
        mask = jnp.array([mask_row], dtype=jnp.float32)
        out2d = pl.pallas_call(
            _log_masked_kernel,
            out_shape=jax.ShapeDtypeStruct((R, L), Y.dtype),
            grid=grid,
            in_specs=[
                data_spec,
                pl.BlockSpec((1, L), lambda i: (0, 0)),  # resident across steps
            ],
            out_specs=data_spec,
            compiler_params=compiler_params,
        )(y2d, mask)

    out = out2d.reshape(-1)[:N].reshape(Y.shape)
    return out, Yvar


# ------------------------------ demo --------------------------------------- #

if __name__ == "__main__":
    key = jax.random.PRNGKey(0)
    # batch_shape=(2,), n=8, m=4  ->  Y: 2 x 8 x 4, strictly positive
    Y = jax.random.uniform(
        key, (2, 8, 4), dtype=jnp.float32, minval=0.1, maxval=3.0
    )

    # Case 1: transform all outputs (outputs=None) -> mask-free kernel
    Y_tf_all, Yvar_all = log_transform_forward(Y, None, outputs=None)
    Y_tf_all = jax.block_until_ready(Y_tf_all)

    # Case 2: transform only a subset of the outputs (includes negative index)
    Y_tf_sub, Yvar_sub = log_transform_forward(Y, None, outputs=[0, -2])
    Y_tf_sub = jax.block_until_ready(Y_tf_sub)

    # Reference checks (plain JAX)
    ref_all = jnp.log(Y)
    ref_sub = jnp.stack(
        [jnp.log(Y[..., i]) if i in (0, 2) else Y[..., i] for i in range(4)],
        axis=-1,
    )
    assert Yvar_all is None and Yvar_sub is None
    assert jnp.allclose(Y_tf_all, ref_all, atol=1e-5, rtol=1e-5)
    assert jnp.allclose(Y_tf_sub, ref_sub, atol=1e-5, rtol=1e-5)

    print("KERNEL_OK")
</pallas_src>

<mosaic_0001>
module attributes {stable_mosaic.version = 11 : i64} {
  func.func @_log_all_kernel(%arg0: i32, %arg1: memref<8x512xf32, #tpu.memory_space<vmem>>, %arg2: memref<8x512xf32, #tpu.memory_space<vmem>>) attributes {dimension_semantics = [#tpu.dimension_semantics<parallel>], iteration_bounds = array<i64: 1>, scalar_prefetch = 0 : i64, scratch_operands = 0 : i64, tpu.core_type = #tpu.core_type<tc>, window_params = [{transform_indices = @transform_0, window_bounds = array<i64: 8, 512>}, {transform_indices = @transform_1, window_bounds = array<i64: 8, 512>}]} {
    %c0 = arith.constant 0 : index
    %c0_0 = arith.constant 0 : index
    %0 = vector.load %arg1[%c0, %c0_0] : memref<8x512xf32, #tpu.memory_space<vmem>>, vector<8x512xf32>
    %1 = math.log %0 : vector<8x512xf32>
    %c0_1 = arith.constant 0 : index
    %c0_2 = arith.constant 0 : index
    %2 = vector.load %arg2[%c0_1, %c0_2] : memref<8x512xf32, #tpu.memory_space<vmem>>, vector<8x512xf32>
    tpu.vector_store %arg2[%c0_1, %c0_2], %1 {strides = array<i32>} : memref<8x512xf32, #tpu.memory_space<vmem>>, vector<8x512xf32>,
    return
  }
  func.func @transform_0(%arg0: i32) -> (i32, i32) {
    %c0_i32 = arith.constant 0 : i32
    %c0_i32_0 = arith.constant 0 : i32
    return %arg0, %c0_i32 : i32, i32
  }
  func.func @transform_1(%arg0: i32) -> (i32, i32) {
    %c0_i32 = arith.constant 0 : i32
    %c0_i32_0 = arith.constant 0 : i32
    return %arg0, %c0_i32 : i32, i32
  }
}

</mosaic_0001>

<llo_original>
// kernel: tpu_custom_call.1
$region0: #{tpu_custom_call.1}
  #allocation0 [shape = 'u32[]', space=smem, size = 0x4, offset = 0x4, fixed_abs, tag = 'smem constant byte address 0x4 - core index']
  #allocation1 [shape = 'u32[144,128]{1,0:T(1,128)}', space=vmem, size = 0x12000, scoped, tag = 'internal scratch']
  %s0 = inlined_call_operand.hbm [shape: f32[8,512], index: 0, kind: input, shape index: {}]
  %s1 = inlined_call_operand.hbm [shape: f32[8,512], index: 1, kind: output, shape index: {}]
  %s2 = sld [smem:[#allocation0]]
  $region18: #{tpu_custom_call.1} parent=0
    _
  %s4 = ssub.s32 1, %s2
  %s5 = scalar_select 0, %s4, %s2
  $region1: #{tpu_custom_call.1} parent=0
    #allocation2 [shape = 'u8[16384]{0}', space=vmem, size = 0x4000, scoped, tag = 'input window, operand 0, single buffered']
    #allocation3 [shape = 's32[1]{0}', space=sflag, size = 0x4, scoped, tag = 'scoped memory for tpu_custom_call.1']
    #allocation4 [shape = 's32[1]{0}', space=sflag, size = 0x4, scoped, tag = 'scoped memory for tpu_custom_call.1']
    #allocation5 [shape = 'u8[16384]{0}', space=vmem, size = 0x4000, scoped, tag = 'output window, operand 0, single buffered']
    %6 = vsyncpa [#allocation3], 0
    %7 = vsyncpa [#allocation4], 0
    // Predicated region
    $region2: #{tpu_custom_call.1} parent=1 // pred_check
      _
    $region3: #{tpu_custom_call.1} parent=1 // pred_check_branch
      %9 = sbr.rel (0) target = $region5
    $region4: #{tpu_custom_call.1} parent=1 // pred_region
      %s11 = ssub.s32 512, 512
      %12 = vsyncadd [#allocation3], %s11
      %s14 = sshll.u32 [#allocation2], 4
      %s15 = int_to_ptr.vmem [resolvable:$true] %s14
      %17 = dma.hbm_to_vmem [thread:$0]  %s0, 512, %s15, [#allocation3]
    $region5: #{tpu_custom_call.1} parent=1 // pred_fallthru
      _
    // Predicated region
    $region6: #{tpu_custom_call.1} parent=1 // pred_check
      _
    $region7: #{tpu_custom_call.1} parent=1 // pred_check_branch
      %19 = sbr.rel (0) target = $region9
    $region8: #{tpu_custom_call.1} parent=1 // pred_region
      %20 = dma.done [#allocation3], 512
    $region9: #{tpu_custom_call.1} parent=1 // pred_fallthru
      _
    %v21 = vld [vmem:[#allocation2] sm:$0xff]
    %v22 = vld [vmem:[#allocation2 + $0x8] sm:$0xff]
    %v23 = vld [vmem:[#allocation2 + $0x10] sm:$0xff]
    %v24 = vld [vmem:[#allocation2 + $0x18] sm:$0xff]
    %v25 = vlog2.pop %v21
    %v26 = vmul.f32 %v25, 0.6931472
    %v27 = vlog2.pop %v22
    %v28 = vmul.f32 %v27, 0.6931472
    %v29 = vlog2.pop %v23
    %v30 = vmul.f32 %v29, 0.6931472
    %v31 = vlog2.pop %v24
    %v32 = vmul.f32 %v31, 0.6931472
    %33 = vst [vmem:[#allocation5] sm:$0xff] %v26
    %34 = vst [vmem:[#allocation5 + $0x8] sm:$0xff] %v28
    %35 = vst [vmem:[#allocation5 + $0x10] sm:$0xff] %v30
    %36 = vst [vmem:[#allocation5 + $0x18] sm:$0xff] %v32
    // Predicated region
    $region10: #{tpu_custom_call.1} parent=1 // pred_check
      _
    $region11: #{tpu_custom_call.1} parent=1 // pred_check_branch
      %38 = sbr.rel (0) target = $region13
    $region12: #{tpu_custom_call.1} parent=1 // pred_region
      %s40 = ssub.s32 512, 512
      %41 = vsyncadd [#allocation4], %s40
      %s43 = sshll.u32 [#allocation5], 4
      %s44 = int_to_ptr.vmem [resolvable:$true] %s43
      %46 = dma.vmem_to_hbm [thread:$0]  %s44, 512, %s1, [#allocation4]
    $region13: #{tpu_custom_call.1} parent=1 // pred_fallthru
      _
    // Predicated region
    $region14: #{tpu_custom_call.1} parent=1 // pred_check
      _
    $region15: #{tpu_custom_call.1} parent=1 // pred_check_branch
      %48 = sbr.rel (0) target = $region17
    $region16: #{tpu_custom_call.1} parent=1 // pred_region
      %49 = dma.done [#allocation4], 512
    $region17: #{tpu_custom_call.1} parent=1 // pred_fallthru
      _
    %50 = vsyncpa [#allocation3], 1
    %51 = vsyncpa [#allocation4], 1

</llo_original>
